<compile_context>
chip_gen: v7x
topology: tpu7x:2x2x1
jax: 0.10.0
libtpu: 0.0.40
codegen_flags: <defaults>
</compile_context>

<pallas_src>
import jax
import jax.numpy as jnp
from jax.experimental import pallas as pl
from jax.experimental.pallas import tpu as pltpu

_MiB = 1024 * 1024


def _round_up(x, m):
    return (x + m - 1) // m * m


def _physical_vmem_bytes():
    try:
        return int(pltpu.get_tpu_info().vmem_capacity_bytes)
    except Exception:
        return 64 * _MiB  # conservative fallback (v7x per-TensorCore VMEM)


# --------------- Pre-pass kernel: z = x @ A.T (computed once) ---------------
def _lora_down_kernel(x_ref, at_ref, z_ref, acc_ref):
    k = pl.program_id(1)

    @pl.when(k == 0)
    def _init():
        acc_ref[...] = jnp.zeros_like(acc_ref)

    acc_ref[...] += jnp.dot(x_ref[...], at_ref[...],
                            preferred_element_type=jnp.float32)

    @pl.when(k == pl.num_programs(1) - 1)
    def _finalize():
        z_ref[...] = acc_ref[...].astype(z_ref.dtype)


# --------------- Main fused kernel: y = bias + x @ Wt + z @ Bt --------------
def _lora_linear_kernel(x_ref, wt_ref, bias_ref, z_ref, bt_ref, o_ref,
                        acc_ref):
    k = pl.program_id(2)

    @pl.when(k == 0)
    def _init():
        # Fold the bias add into the accumulator init (saves a VPU pass and
        # the separate epilogue add).
        acc_ref[...] = bias_ref[...] + jnp.zeros_like(acc_ref)

    acc_ref[...] += jnp.dot(x_ref[...], wt_ref[...],
                            preferred_element_type=jnp.float32)

    @pl.when(k == pl.num_programs(2) - 1)
    def _finalize():
        # LoRA up-projection (lora_weight already folded into Bt), fused into
        # the single output store. z / Bt blocks are resident across k.
        lora = jnp.dot(z_ref[...], bt_ref[...],
                       preferred_element_type=jnp.float32)
        o_ref[...] = (acc_ref[...] + lora).astype(o_ref.dtype)


def make_lora_linear(w, b, a, bmat, lora_weight=0.5, *,
                     tm=512, tn=512, tk=512,
                     compute_dtype=jnp.bfloat16, buffer_depth=2):
    """Builds a jitted LoRALinear forward.

    w: (out, in) frozen linear weight; b: (out,) bias;
    a: (rank, in) lora_A weight;       bmat: (out, rank) lora_B weight.

    All weight transposes / padding / lora_weight folding happen once here.
    compute_dtype defaults to bfloat16 (f32 accumulation); pass jnp.float32
    for bit-accurate comparison against an f32 reference.
    buffer_depth > 2 adds deeper pipelining on the x/Wt streams (worth
    sweeping to 3 on bandwidth-poor v5e).
    """
    N, K = w.shape
    R = a.shape[0]
    cdt = jnp.dtype(compute_dtype)

    # ---- Tile selection (lane dims multiples of 128, sublane dims of 8) ----
    Np0 = _round_up(N, 128)
    tn_ = min(tn, Np0)
    if tn_ >= Np0 and Np0 >= 256:
        # Keep >= 2 N blocks so both v7x TensorCores have work even when the
        # M grid collapses to a single block (decode-sized batches).
        tn_ = 128 * ((Np0 // 128 + 1) // 2)
    Np = _round_up(N, tn_)

    tk_ = min(tk, _round_up(K, 128))
    Kp = _round_up(K, tk_)
    # TODO(synk): keep rank on the sublane axis (compute z.T) to avoid padding
    # tiny ranks up to 128 lanes; negligible vs the base matmul after the
    # pre-pass, so left as-is.
    Rp = _round_up(R, 128)

    # ---- One-time parameter prep: lane-dense transposes, padding, folding --
    wt = jnp.zeros((Kp, Np), cdt).at[:K, :N].set(jnp.transpose(w).astype(cdt))
    at = jnp.zeros((Kp, Rp), cdt).at[:K, :R].set(jnp.transpose(a).astype(cdt))
    bt = jnp.zeros((Rp, Np), cdt).at[:R, :N].set(
        (lora_weight * jnp.transpose(bmat)).astype(cdt))
    b2 = jnp.zeros((1, Np), jnp.float32).at[0, :N].set(b.astype(jnp.float32))

    isz = jnp.dtype(cdt).itemsize
    vmem_cap = max(32 * _MiB, _physical_vmem_bytes() - 8 * _MiB)

    # Deeper buffering on the streamed operands (x / Wt) only when requested.
    stream_kw = ({} if buffer_depth <= 2
                 else {"pipeline_mode": pl.Buffered(buffer_depth)})

    def apply(x):
        M = x.shape[0]
        out_dtype = x.dtype
        tm_ = min(tm, _round_up(M, 8))
        Mp = _round_up(M, tm_)

        # Only touch x when a cast or padding is actually required.
        xp = x.astype(cdt) if x.dtype != cdt else x
        if (Mp, Kp) != (M, K):
            xp = jnp.pad(xp, ((0, Mp - M), (0, Kp - K)))

        nm, nn, nk = Mp // tm_, Np // tn_, Kp // tk_

        # ---------------- Pre-pass: z = x @ A.T (once per row block) -------
        z = pl.pallas_call(
            _lora_down_kernel,
            out_shape=jax.ShapeDtypeStruct((Mp, Rp), cdt),
            grid_spec=pltpu.PrefetchScalarGridSpec(
                num_scalar_prefetch=0,
                grid=(nm, nk),
                in_specs=[
                    pl.BlockSpec((tm_, tk_), lambda i, k: (i, k)),   # x
                    pl.BlockSpec((tk_, Rp), lambda i, k: (k, 0)),    # At
                ],
                out_specs=pl.BlockSpec((tm_, Rp), lambda i, k: (i, 0)),
                scratch_shapes=[pltpu.VMEM((tm_, Rp), jnp.float32)],
            ),
            compiler_params=pltpu.CompilerParams(
                dimension_semantics=("parallel", "arbitrary"),
                vmem_limit_bytes=int(min(vmem_cap, 32 * _MiB)),
            ),
            cost_estimate=pl.CostEstimate(
                flops=2 * Mp * Rp * Kp, transcendentals=0,
                bytes_accessed=int(isz * (Mp * Kp + Kp * Rp + Mp * Rp))),
        )(xp, at)

        # ---------------- Main fused kernel ---------------------------------
        vmem_est = (2 * isz * (tm_ * tk_ + tk_ * tn_ + tm_ * Rp + Rp * tn_)
                    + 2 * 4 * tn_
                    + 2 * jnp.dtype(out_dtype).itemsize * tm_ * tn_
                    + 4 * tm_ * tn_)
        vmem_limit = int(min(vmem_cap, max(32 * _MiB, 2 * vmem_est)))

        flops = 2 * Mp * Np * Kp + 2 * Mp * Rp * Np
        bytes_accessed = (isz * (Mp * Kp + Kp * Np + Mp * Rp + Rp * Np)
                          + 4 * Np
                          + jnp.dtype(out_dtype).itemsize * Mp * Np)

        out = pl.pallas_call(
            _lora_linear_kernel,
            out_shape=jax.ShapeDtypeStruct((Mp, Np), out_dtype),
            grid_spec=pltpu.PrefetchScalarGridSpec(
                num_scalar_prefetch=0,
                grid=(nm, nn, nk),
                in_specs=[
                    pl.BlockSpec((tm_, tk_), lambda i, j, k: (i, k),
                                 **stream_kw),                          # x
                    pl.BlockSpec((tk_, tn_), lambda i, j, k: (k, j),
                                 **stream_kw),                          # Wt
                    pl.BlockSpec((1, tn_), lambda i, j, k: (0, j)),     # bias
                    pl.BlockSpec((tm_, Rp), lambda i, j, k: (i, 0)),    # z
                    pl.BlockSpec((Rp, tn_), lambda i, j, k: (0, j)),    # Bt
                ],
                out_specs=pl.BlockSpec((tm_, tn_), lambda i, j, k: (i, j)),
                scratch_shapes=[pltpu.VMEM((tm_, tn_), jnp.float32)],
            ),
            compiler_params=pltpu.CompilerParams(
                dimension_semantics=("parallel", "parallel", "arbitrary"),
                vmem_limit_bytes=vmem_limit,
            ),
            cost_estimate=pl.CostEstimate(
                flops=flops, transcendentals=0,
                bytes_accessed=int(bytes_accessed)),
        )(xp, wt, b2, z, bt)

        return out[:M, :N]

    return jax.jit(apply)


if __name__ == "__main__":
    LORA_WEIGHT = 0.5

    def run_case(M, IN, OUT, RANK, seed, compute_dtype, atol, rtol):
        key = jax.random.PRNGKey(seed)
        kx, kw, kb, ka, kB = jax.random.split(key, 5)
        x = jax.random.normal(kx, (M, IN), dtype=jnp.float32)
        w = jax.random.normal(kw, (OUT, IN), dtype=jnp.float32) * 0.1
        bias = jax.random.normal(kb, (OUT,), dtype=jnp.float32) * 0.1
        a = jax.random.normal(ka, (RANK, IN), dtype=jnp.float32) * 0.1
        bmat = jax.random.normal(kB, (OUT, RANK), dtype=jnp.float32) * 0.1

        fwd = make_lora_linear(w, bias, a, bmat, LORA_WEIGHT,
                               compute_dtype=compute_dtype)
        out = jax.block_until_ready(fwd(x))

        ref = (x @ w.T + bias) + LORA_WEIGHT * ((x @ a.T) @ bmat.T)
        assert out.shape == (M, OUT)
        assert jnp.allclose(out, ref, atol=atol, rtol=rtol), \
            f"mismatch vs reference for case {(M, IN, OUT, RANK, compute_dtype)}"

    # Exact f32 compute path: validates tiling / padding / fused epilogue.
    run_case(M=16, IN=32, OUT=64, RANK=16, seed=0,
             compute_dtype=jnp.float32, atol=1e-4, rtol=1e-4)
    # Non-aligned shapes exercise padding, tile clamping, and the N split.
    run_case(M=50, IN=96, OUT=160, RANK=8, seed=1,
             compute_dtype=jnp.float32, atol=1e-4, rtol=1e-4)
    # Default (production) bf16 compute path: looser tolerance vs f32 ref.
    run_case(M=50, IN=96, OUT=160, RANK=8, seed=2,
             compute_dtype=jnp.bfloat16, atol=7e-2, rtol=7e-2)

    print("KERNEL_OK")
</pallas_src>

<mosaic_0001>
module attributes {stable_mosaic.version = 11 : i64} {
  func.func @_lora_down_kernel(%arg0: i32, %arg1: i32, %arg2: memref<16x128xf32, #tpu.memory_space<vmem>>, %arg3: memref<128x128xf32, #tpu.memory_space<vmem>>, %arg4: memref<16x128xf32, #tpu.memory_space<vmem>>, %arg5: memref<16x128xf32, #tpu.memory_space<vmem>>) attributes {dimension_semantics = [#tpu.dimension_semantics<parallel>, #tpu.dimension_semantics<arbitrary>], iteration_bounds = array<i64: 1, 1>, scalar_prefetch = 0 : i64, scratch_operands = 1 : i64, tpu.core_type = #tpu.core_type<tc>, window_params = [{transform_indices = @transform_0, window_bounds = array<i64: 16, 128>}, {transform_indices = @transform_1, window_bounds = array<i64: 128, 128>}, {transform_indices = @transform_2, window_bounds = array<i64: 16, 128>}]} {
    %c0_i32 = arith.constant 0 : i32
    %0 = arith.cmpi eq, %arg1, %c0_i32 : i32
    %1 = arith.extui %0 : i1 to i32
    %c0_i32_0 = arith.constant 0 : i32
    %2 = arith.cmpi ne, %1, %c0_i32_0 : i32
    scf.if %2 {
      %cst_10 = arith.constant 0.000000e+00 : f32
      %12 = vector.broadcast %cst_10 : f32 to vector<16x128xf32>
      %c0_11 = arith.constant 0 : index
      %c0_12 = arith.constant 0 : index
      %13 = vector.load %arg5[%c0_11, %c0_12] : memref<16x128xf32, #tpu.memory_space<vmem>>, vector<16x128xf32>
      tpu.vector_store %arg5[%c0_11, %c0_12], %12 {strides = array<i32>} : memref<16x128xf32, #tpu.memory_space<vmem>>, vector<16x128xf32>,
    } else {
    }
    %c0 = arith.constant 0 : index
    %c0_1 = arith.constant 0 : index
    %3 = vector.load %arg5[%c0, %c0_1] : memref<16x128xf32, #tpu.memory_space<vmem>>, vector<16x128xf32>
    %c0_2 = arith.constant 0 : index
    %c0_3 = arith.constant 0 : index
    %4 = vector.load %arg2[%c0_2, %c0_3] : memref<16x128xf32, #tpu.memory_space<vmem>>, vector<16x128xf32>
    %c0_4 = arith.constant 0 : index
    %c0_5 = arith.constant 0 : index
    %5 = vector.load %arg3[%c0_4, %c0_5] : memref<128x128xf32, #tpu.memory_space<vmem>>, vector<128x128xf32>
    %cst = arith.constant dense<0.000000e+00> : vector<16x128xf32>
    %6 = tpu.matmul %4, %5, %cst {dimension_numbers = #tpu.dot_dimension_numbers<[1], [0], [0], [1], [0, 0, 1, 1], [], []>} : vector<16x128xf32>, vector<128x128xf32>, vector<16x128xf32> -> vector<16x128xf32>
    %7 = arith.addf %3, %6 : vector<16x128xf32>
    %c0_6 = arith.constant 0 : index
    %c0_7 = arith.constant 0 : index
    %8 = vector.load %arg5[%c0_6, %c0_7] : memref<16x128xf32, #tpu.memory_space<vmem>>, vector<16x128xf32>
    tpu.vector_store %arg5[%c0_6, %c0_7], %7 {strides = array<i32>} : memref<16x128xf32, #tpu.memory_space<vmem>>, vector<16x128xf32>,
    %c0_i32_8 = arith.constant 0 : i32
    %9 = arith.cmpi eq, %arg1, %c0_i32_8 : i32
    %10 = arith.extui %9 : i1 to i32
    %c0_i32_9 = arith.constant 0 : i32
    %11 = arith.cmpi ne, %10, %c0_i32_9 : i32
    scf.if %11 {
      %c0_10 = arith.constant 0 : index
      %c0_11 = arith.constant 0 : index
      %12 = vector.load %arg5[%c0_10, %c0_11] : memref<16x128xf32, #tpu.memory_space<vmem>>, vector<16x128xf32>
      %c0_12 = arith.constant 0 : index
      %c0_13 = arith.constant 0 : index
      %13 = vector.load %arg4[%c0_12, %c0_13] : memref<16x128xf32, #tpu.memory_space<vmem>>, vector<16x128xf32>
      tpu.vector_store %arg4[%c0_12, %c0_13], %12 {strides = array<i32>} : memref<16x128xf32, #tpu.memory_space<vmem>>, vector<16x128xf32>,
    } else {
    }
    return
  }
  func.func @transform_0(%arg0: i32, %arg1: i32) -> (i32, i32) {
    %c0_i32 = arith.constant 0 : i32
    return %arg0, %arg1 : i32, i32
  }
  func.func @transform_1(%arg0: i32, %arg1: i32) -> (i32, i32) {
    %c0_i32 = arith.constant 0 : i32
    %c0_i32_0 = arith.constant 0 : i32
    return %arg1, %c0_i32 : i32, i32
  }
  func.func @transform_2(%arg0: i32, %arg1: i32) -> (i32, i32) {
    %c0_i32 = arith.constant 0 : i32
    %c0_i32_0 = arith.constant 0 : i32
    return %arg0, %c0_i32 : i32, i32
  }
}

module attributes {stable_mosaic.version = 11 : i64} {
  func.func @_lora_linear_kernel(%arg0: i32, %arg1: i32, %arg2: i32, %arg3: memref<16x128xf32, #tpu.memory_space<vmem>>, %arg4: memref<128x128xf32, #tpu.memory_space<vmem>>, %arg5: memref<1x128xf32, #tpu.memory_space<vmem>>, %arg6: memref<16x128xf32, #tpu.memory_space<vmem>>, %arg7: memref<128x128xf32, #tpu.memory_space<vmem>>, %arg8: memref<16x128xf32, #tpu.memory_space<vmem>>, %arg9: memref<16x128xf32, #tpu.memory_space<vmem>>) attributes {dimension_semantics = [#tpu.dimension_semantics<parallel>, #tpu.dimension_semantics<parallel>, #tpu.dimension_semantics<arbitrary>], iteration_bounds = array<i64: 1, 1, 1>, scalar_prefetch = 0 : i64, scratch_operands = 1 : i64, tpu.core_type = #tpu.core_type<tc>, window_params = [{transform_indices = @transform_0, window_bounds = array<i64: 16, 128>}, {transform_indices = @transform_1, window_bounds = array<i64: 128, 128>}, {transform_indices = @transform_2, window_bounds = array<i64: 1, 128>}, {transform_indices = @transform_3, window_bounds = array<i64: 16, 128>}, {transform_indices = @transform_4, window_bounds = array<i64: 128, 128>}, {transform_indices = @transform_5, window_bounds = array<i64: 16, 128>}]} {
    %c0_i32 = arith.constant 0 : i32
    %0 = arith.cmpi eq, %arg2, %c0_i32 : i32
    %1 = arith.extui %0 : i1 to i32
    %c0_i32_0 = arith.constant 0 : i32
    %2 = arith.cmpi ne, %1, %c0_i32_0 : i32
    scf.if %2 {
      %c0_10 = arith.constant 0 : index
      %c0_11 = arith.constant 0 : index
      %12 = vector.load %arg5[%c0_10, %c0_11] : memref<1x128xf32, #tpu.memory_space<vmem>>, vector<1x128xf32>
      %cst_12 = arith.constant 0.000000e+00 : f32
      %13 = vector.broadcast %cst_12 : f32 to vector<16x128xf32>
      %14 = vector.broadcast %12 : vector<1x128xf32> to vector<16x128xf32>
      %15 = arith.addf %14, %13 : vector<16x128xf32>
      %c0_13 = arith.constant 0 : index
      %c0_14 = arith.constant 0 : index
      %16 = vector.load %arg9[%c0_13, %c0_14] : memref<16x128xf32, #tpu.memory_space<vmem>>, vector<16x128xf32>
      tpu.vector_store %arg9[%c0_13, %c0_14], %15 {strides = array<i32>} : memref<16x128xf32, #tpu.memory_space<vmem>>, vector<16x128xf32>,
    } else {
    }
    %c0 = arith.constant 0 : index
    %c0_1 = arith.constant 0 : index
    %3 = vector.load %arg9[%c0, %c0_1] : memref<16x128xf32, #tpu.memory_space<vmem>>, vector<16x128xf32>
    %c0_2 = arith.constant 0 : index
    %c0_3 = arith.constant 0 : index
    %4 = vector.load %arg3[%c0_2, %c0_3] : memref<16x128xf32, #tpu.memory_space<vmem>>, vector<16x128xf32>
    %c0_4 = arith.constant 0 : index
    %c0_5 = arith.constant 0 : index
    %5 = vector.load %arg4[%c0_4, %c0_5] : memref<128x128xf32, #tpu.memory_space<vmem>>, vector<128x128xf32>
    %cst = arith.constant dense<0.000000e+00> : vector<16x128xf32>
    %6 = tpu.matmul %4, %5, %cst {dimension_numbers = #tpu.dot_dimension_numbers<[1], [0], [0], [1], [0, 0, 1, 1], [], []>} : vector<16x128xf32>, vector<128x128xf32>, vector<16x128xf32> -> vector<16x128xf32>
    %7 = arith.addf %3, %6 : vector<16x128xf32>
    %c0_6 = arith.constant 0 : index
    %c0_7 = arith.constant 0 : index
    %8 = vector.load %arg9[%c0_6, %c0_7] : memref<16x128xf32, #tpu.memory_space<vmem>>, vector<16x128xf32>
    tpu.vector_store %arg9[%c0_6, %c0_7], %7 {strides = array<i32>} : memref<16x128xf32, #tpu.memory_space<vmem>>, vector<16x128xf32>,
    %c0_i32_8 = arith.constant 0 : i32
    %9 = arith.cmpi eq, %arg2, %c0_i32_8 : i32
    %10 = arith.extui %9 : i1 to i32
    %c0_i32_9 = arith.constant 0 : i32
    %11 = arith.cmpi ne, %10, %c0_i32_9 : i32
    scf.if %11 {
      %c0_10 = arith.constant 0 : index
      %c0_11 = arith.constant 0 : index
      %12 = vector.load %arg6[%c0_10, %c0_11] : memref<16x128xf32, #tpu.memory_space<vmem>>, vector<16x128xf32>
      %c0_12 = arith.constant 0 : index
      %c0_13 = arith.constant 0 : index
      %13 = vector.load %arg7[%c0_12, %c0_13] : memref<128x128xf32, #tpu.memory_space<vmem>>, vector<128x128xf32>
      %cst_14 = arith.constant dense<0.000000e+00> : vector<16x128xf32>
      %14 = tpu.matmul %12, %13, %cst_14 {dimension_numbers = #tpu.dot_dimension_numbers<[1], [0], [0], [1], [0, 0, 1, 1], [], []>} : vector<16x128xf32>, vector<128x128xf32>, vector<16x128xf32> -> vector<16x128xf32>
      %c0_15 = arith.constant 0 : index
      %c0_16 = arith.constant 0 : index
      %15 = vector.load %arg9[%c0_15, %c0_16] : memref<16x128xf32, #tpu.memory_space<vmem>>, vector<16x128xf32>
      %16 = arith.addf %15, %14 : vector<16x128xf32>
      %c0_17 = arith.constant 0 : index
      %c0_18 = arith.constant 0 : index
      %17 = vector.load %arg8[%c0_17, %c0_18] : memref<16x128xf32, #tpu.memory_space<vmem>>, vector<16x128xf32>
      tpu.vector_store %arg8[%c0_17, %c0_18], %16 {strides = array<i32>} : memref<16x128xf32, #tpu.memory_space<vmem>>, vector<16x128xf32>,
    } else {
    }
    return
  }
  func.func @transform_0(%arg0: i32, %arg1: i32, %arg2: i32) -> (i32, i32) {
    %c0_i32 = arith.constant 0 : i32
    return %arg0, %arg2 : i32, i32
  }
  func.func @transform_1(%arg0: i32, %arg1: i32, %arg2: i32) -> (i32, i32) {
    %c0_i32 = arith.constant 0 : i32
    return %arg2, %arg1 : i32, i32
  }
  func.func @transform_2(%arg0: i32, %arg1: i32, %arg2: i32) -> (i32, i32) {
    %c0_i32 = arith.constant 0 : i32
    %c0_i32_0 = arith.constant 0 : i32
    return %c0_i32, %arg1 : i32, i32
  }
  func.func @transform_3(%arg0: i32, %arg1: i32, %arg2: i32) -> (i32, i32) {
    %c0_i32 = arith.constant 0 : i32
    %c0_i32_0 = arith.constant 0 : i32
    return %arg0, %c0_i32 : i32, i32
  }
  func.func @transform_4(%arg0: i32, %arg1: i32, %arg2: i32) -> (i32, i32) {
    %c0_i32 = arith.constant 0 : i32
    %c0_i32_0 = arith.constant 0 : i32
    return %c0_i32, %arg1 : i32, i32
  }
  func.func @transform_5(%arg0: i32, %arg1: i32, %arg2: i32) -> (i32, i32) {
    %c0_i32 = arith.constant 0 : i32
    return %arg0, %arg1 : i32, i32
  }
}

</mosaic_0001>

<llo_original>
// kernel: apply.3
$region0: #{apply.3}
  #allocation0 [shape = 'u32[]', space=smem, size = 0x4, offset = 0x4, fixed_abs, tag = 'smem constant byte address 0x4 - core index']
  #allocation1 [shape = 'u32[144,128]{1,0:T(1,128)}', space=vmem, size = 0x12000, scoped, tag = 'internal scratch']
  #allocation2 [shape = 'f32[16,128]{1,0:T(8,128)}', space=vmem, size = 0x2000, scoped, tag = 'scratch operand']
  %s0 = inlined_call_operand.vmem [shape: f32[16,128], index: 0, kind: input, shape index: {}]
  %s1 = inlined_call_operand.hbm [shape: f32[128,128], index: 1, kind: input, shape index: {}]
  %s2 = inlined_call_operand.vmem [shape: f32[1,128], index: 2, kind: input, shape index: {}]
  %s3 = inlined_call_operand.vmem [shape: f32[16,128], index: 3, kind: input, shape index: {}]
  %s4 = inlined_call_operand.vmem [shape: f32[128,128], index: 4, kind: input, shape index: {}]
  %s5 = inlined_call_operand.hbm [shape: f32[16,128], index: 5, kind: output, shape index: {}]
  %s6 = sld [smem:[#allocation0]]
  $region42: #{apply.3} parent=0
    _
  %s8 = ssub.s32 1, %s6
  %s9 = scalar_select 0, %s8, %s6
  $region1: #{apply.3} parent=0
    #allocation3 [shape = 'u8[65536]{0}', space=vmem, size = 0x10000, scoped, tag = 'input window, operand 1, single buffered']
    #allocation4 [shape = 's32[1]{0}', space=sflag, size = 0x4, scoped, tag = 'scoped memory for apply.3']
    #allocation5 [shape = 's32[1]{0}', space=sflag, size = 0x4, scoped, tag = 'scoped memory for apply.3']
    #allocation6 [shape = 'u8[8192]{0}', space=vmem, size = 0x2000, scoped, tag = 'output window, operand 0, single buffered']
    %10 = vsyncpa [#allocation4], 0
    %11 = vsyncpa [#allocation5], 0
    // Predicated region
    $region2: #{apply.3} parent=1 // pred_check
      _
    $region3: #{apply.3} parent=1 // pred_check_branch
      %13 = sbr.rel (0) target = $region5
    $region4: #{apply.3} parent=1 // pred_region
      _
    $region5: #{apply.3} parent=1 // pred_fallthru
      _
    // Predicated region
    $region6: #{apply.3} parent=1 // pred_check
      _
    $region7: #{apply.3} parent=1 // pred_check_branch
      %15 = sbr.rel (0) target = $region9
    $region8: #{apply.3} parent=1 // pred_region
      %s17 = ssub.s32 2048, 2048
      %18 = vsyncadd [#allocation4], %s17
      %s19 = sshll.u32 [#allocation3], 4
      %s20 = int_to_ptr.vmem [resolvable:$true] %s19
      %25 = dma.hbm_to_vmem [thread:$0]  %s1, 2048, %s20, [#allocation4], 128, 128, 8
    $region9: #{apply.3} parent=1 // pred_fallthru
      _
    // Predicated region
    $region10: #{apply.3} parent=1 // pred_check
      _
    $region11: #{apply.3} parent=1 // pred_check_branch
      %27 = sbr.rel (0) target = $region13
    $region12: #{apply.3} parent=1 // pred_region
      _
    $region13: #{apply.3} parent=1 // pred_fallthru
      _
    // Predicated region
    $region14: #{apply.3} parent=1 // pred_check
      _
    $region15: #{apply.3} parent=1 // pred_check_branch
      %29 = sbr.rel (0) target = $region17
    $region16: #{apply.3} parent=1 // pred_region
      _
    $region17: #{apply.3} parent=1 // pred_fallthru
      _
    // Predicated region
    $region18: #{apply.3} parent=1 // pred_check
      _
    $region19: #{apply.3} parent=1 // pred_check_branch
      %31 = sbr.rel (0) target = $region21
    $region20: #{apply.3} parent=1 // pred_region
      _
    $region21: #{apply.3} parent=1 // pred_fallthru
      _
    // Predicated region
    $region22: #{apply.3} parent=1 // pred_check
      _
    $region23: #{apply.3} parent=1 // pred_check_branch
      %33 = sbr.rel (0) target = $region25
    $region24: #{apply.3} parent=1 // pred_region
      %34 = dma.done [#allocation4], 2048
    $region25: #{apply.3} parent=1 // pred_fallthru
      _
    %p35 = scmp.eq.s32.totalorder 0, 0
    // Predicated region
    $region26: #{apply.3} parent=1 // pred_check
      %p36 = pneg %p35
    $region27: #{apply.3} parent=1 // pred_check_branch
      %38 = sbr.rel (%p36) target = $region29
    $region28: #{apply.3} parent=1 // pred_region
      %v39 = vld [vmem:[%s2] sm:$0x1]
      %v41 = vlaneseq
      %v42 = vshrl.u32 %v41, 7
      %v43 = vsub.s32 0, %v42
      %v44 = vrot.slane %v39, %v43
      %v46 = vadd.f32 %v44, 0.0
      %47 = vst [vmem:[#allocation2] sm:$0xff] %v46
      %48 = vst [vmem:[#allocation2 + $0x8] sm:$0xff] %v46
    $region29: #{apply.3} parent=1 // pred_fallthru
      _
    %v49 = vld [vmem:[#allocation2] sm:$0xff]
    %v50 = vld [vmem:[#allocation2 + $0x8] sm:$0xff]
    %v51 = vld [vmem:[%s0] sm:$0xff]
    %v52 = vld [vmem:[%s0 + $0x8] sm:$0xff]
    %v53 = vld [vmem:[#allocation3] sm:$0xff]
    %v54 = vld [vmem:[#allocation3 + $0x8] sm:$0xff]
    %v55 = vld [vmem:[#allocation3 + $0x10] sm:$0xff]
    %v56 = vld [vmem:[#allocation3 + $0x18] sm:$0xff]
    %v57 = vld [vmem:[#allocation3 + $0x20] sm:$0xff]
    %v58 = vld [vmem:[#allocation3 + $0x28] sm:$0xff]
    %v59 = vld [vmem:[#allocation3 + $0x30] sm:$0xff]
    %v60 = vld [vmem:[#allocation3 + $0x38] sm:$0xff]
    %v61 = vld [vmem:[#allocation3 + $0x40] sm:$0xff]
    %v62 = vld [vmem:[#allocation3 + $0x48] sm:$0xff]
    %v63 = vld [vmem:[#allocation3 + $0x50] sm:$0xff]
    %v64 = vld [vmem:[#allocation3 + $0x58] sm:$0xff]
    %v65 = vld [vmem:[#allocation3 + $0x60] sm:$0xff]
    %v66 = vld [vmem:[#allocation3 + $0x68] sm:$0xff]
    %v67 = vld [vmem:[#allocation3 + $0x70] sm:$0xff]
    %v68 = vld [vmem:[#allocation3 + $0x78] sm:$0xff]
    %69 = vmatprep.subr.mxu0 0.0
    %70 = vmatpush1.msra.mxu0 %v53
    %71 = vmatprep.subr.mxu0 0.0
    %72 = vmatpush1.msra.mxu0 %v54
    %73 = vmatprep.subr.mxu0 0.0
    %74 = vmatpush1.msra.mxu0 %v55
    %75 = vmatprep.subr.mxu0 0.0
    %76 = vmatpush1.msra.mxu0 %v56
    %77 = vmatprep.subr.mxu0 0.0
    %78 = vmatpush1.msra.mxu0 %v57
    %79 = vmatprep.subr.mxu0 0.0
    %80 = vmatpush1.msra.mxu0 %v58
    %81 = vmatprep.subr.mxu0 0.0
    %82 = vmatpush1.msra.mxu0 %v59
    %83 = vmatprep.subr.mxu0 0.0
    %84 = vmatpush1.msra.mxu0 %v60
    %85 = vmatprep.subr.mxu0 0.0
    %86 = vmatpush1.msra.mxu0 %v61
    %87 = vmatprep.subr.mxu0 0.0
    %88 = vmatpush1.msra.mxu0 %v62
    %89 = vmatprep.subr.mxu0 0.0
    %90 = vmatpush1.msra.mxu0 %v63
    %91 = vmatprep.subr.mxu0 0.0
    %92 = vmatpush1.msra.mxu0 %v64
    %93 = vmatprep.subr.mxu0 0.0
    %94 = vmatpush1.msra.mxu0 %v65
    %95 = vmatprep.subr.mxu0 0.0
    %96 = vmatpush1.msra.mxu0 %v66
    %97 = vmatprep.subr.mxu0 0.0
    %98 = vmatpush1.msra.mxu0 %v67
    %99 = vmatprep.subr.mxu0 0.0
    %100 = vmatpush1.msra.mxu0 %v68
    %101 = vmatprep.subr.mxu0 0.0
    %102 = vmatpush1.msra.mxu0 0.0
    %103 = vmatprep.subr.mxu0 0.0
    %104 = vmatpush1.msra.mxu0 0.0
    %105 = vmatprep.subr.mxu0 0.0
    %106 = vmatpush1.msra.mxu0 0.0
    %107 = vmatprep.subr.mxu0 0.0
    %108 = vmatpush1.msra.mxu0 0.0
    %109 = vmatprep.subr.mxu0 0.0
    %110 = vmatpush1.msra.mxu0 0.0
    %111 = vmatprep.subr.mxu0 0.0
    %112 = vmatpush1.msra.mxu0 0.0
    %113 = vmatprep.subr.mxu0 0.0
    %114 = vmatpush1.msra.mxu0 0.0
    %115 = vmatprep.subr.mxu0 0.0
    %116 = vmatpush1.msra.mxu0 0.0
    %117 = vmatprep.subr.mxu0 0.0
    %118 = vmatpush1.msra.mxu0 0.0
    %119 = vmatprep.subr.mxu0 0.0
    %120 = vmatpush1.msra.mxu0 0.0
    %121 = vmatprep.subr.mxu0 0.0
    %122 = vmatpush1.msra.mxu0 0.0
    %123 = vmatprep.subr.mxu0 0.0
    %124 = vmatpush1.msra.mxu0 0.0
    %125 = vmatprep.subr.mxu0 0.0
    %126 = vmatpush1.msra.mxu0 0.0
    %127 = vmatprep.subr.mxu0 0.0
    %128 = vmatpush1.msra.mxu0 0.0
    %129 = vmatprep.subr.mxu0 0.0
    %130 = vmatpush1.msra.mxu0 0.0
    %131 = vmatprep.subr.mxu0 0.0
    %132 = vmatpush1.msra.mxu0 0.0
    %133 = vmatprep.mubr.f32.mxu0 0.0
    %134 = vmatmul.mubr.f32.gmra.mrb[0].mxu0 %v51
    %v135 = vpop.f32.mrb[0].mxu0
    %v136 = vadd.f32 0.0, %v135
    %v137 = vpop.f32.mrb[0].mxu0
    %138 = vmatprep.mubr.f32.mxu0 0.0
    %139 = vmatmul.mubr.f32.gmra.mrb[0].mxu0 %v52
    %v140 = vpop.f32.mrb[0].mxu0
    %v141 = vadd.f32 0.0, %v140
    %v142 = vpop.f32.mrb[0].mxu0
    %143 = vdwg.mxu0
    %v144 = vadd.f32 %v49, %v136
    %v145 = vadd.f32 %v50, %v141
    %146 = vst [vmem:[#allocation2] sm:$0xff] %v144
    %147 = vst [vmem:[#allocation2 + $0x8] sm:$0xff] %v145
    // Predicated region
    $region30: #{apply.3} parent=1 // pred_check
      %p148 = pneg %p35
    $region31: #{apply.3} parent=1 // pred_check_branch
      %150 = sbr.rel (%p148) target = $region33
    $region32: #{apply.3} parent=1 // pred_region
      %v151 = vld [vmem:[%s3] sm:$0xff]
      %v152 = vld [vmem:[%s3 + $0x8] sm:$0xff]
      %v153 = vld [vmem:[%s4] sm:$0xff]
      %v154 = vld [vmem:[%s4 + $0x8] sm:$0xff]
      %v155 = vld [vmem:[%s4 + $0x10] sm:$0xff]
      %v156 = vld [vmem:[%s4 + $0x18] sm:$0xff]
      %v157 = vld [vmem:[%s4 + $0x20] sm:$0xff]
      %v158 = vld [vmem:[%s4 + $0x28] sm:$0xff]
      %v159 = vld [vmem:[%s4 + $0x30] sm:$0xff]
      %v160 = vld [vmem:[%s4 + $0x38] sm:$0xff]
      %v161 = vld [vmem:[%s4 + $0x40] sm:$0xff]
      %v162 = vld [vmem:[%s4 + $0x48] sm:$0xff]
      %v163 = vld [vmem:[%s4 + $0x50] sm:$0xff]
      %v164 = vld [vmem:[%s4 + $0x58] sm:$0xff]
      %v165 = vld [vmem:[%s4 + $0x60] sm:$0xff]
      %v166 = vld [vmem:[%s4 + $0x68] sm:$0xff]
      %v167 = vld [vmem:[%s4 + $0x70] sm:$0xff]
      %v168 = vld [vmem:[%s4 + $0x78] sm:$0xff]
      %169 = vmatprep.subr.mxu0 0.0
      %170 = vmatpush1.msra.mxu0 %v153
      %171 = vmatprep.subr.mxu0 0.0
      %172 = vmatpush1.msra.mxu0 %v154
      %173 = vmatprep.subr.mxu0 0.0
      %174 = vmatpush1.msra.mxu0 %v155
      %175 = vmatprep.subr.mxu0 0.0
      %176 = vmatpush1.msra.mxu0 %v156
      %177 = vmatprep.subr.mxu0 0.0
      %178 = vmatpush1.msra.mxu0 %v157
      %179 = vmatprep.subr.mxu0 0.0
      %180 = vmatpush1.msra.mxu0 %v158
      %181 = vmatprep.subr.mxu0 0.0
      %182 = vmatpush1.msra.mxu0 %v159
      %183 = vmatprep.subr.mxu0 0.0
      %184 = vmatpush1.msra.mxu0 %v160
      %185 = vmatprep.subr.mxu0 0.0
      %186 = vmatpush1.msra.mxu0 %v161
      %187 = vmatprep.subr.mxu0 0.0
      %188 = vmatpush1.msra.mxu0 %v162
      %189 = vmatprep.subr.mxu0 0.0
      %190 = vmatpush1.msra.mxu0 %v163
      %191 = vmatprep.subr.mxu0 0.0
      %192 = vmatpush1.msra.mxu0 %v164
      %193 = vmatprep.subr.mxu0 0.0
      %194 = vmatpush1.msra.mxu0 %v165
      %195 = vmatprep.subr.mxu0 0.0
      %196 = vmatpush1.msra.mxu0 %v166
      %197 = vmatprep.subr.mxu0 0.0
      %198 = vmatpush1.msra.mxu0 %v167
      %199 = vmatprep.subr.mxu0 0.0
      %200 = vmatpush1.msra.mxu0 %v168
      %201 = vmatprep.subr.mxu0 0.0
      %202 = vmatpush1.msra.mxu0 0.0
      %203 = vmatprep.subr.mxu0 0.0
      %204 = vmatpush1.msra.mxu0 0.0
      %205 = vmatprep.subr.mxu0 0.0
      %206 = vmatpush1.msra.mxu0 0.0
      %207 = vmatprep.subr.mxu0 0.0
      %208 = vmatpush1.msra.mxu0 0.0
      %209 = vmatprep.subr.mxu0 0.0
      %210 = vmatpush1.msra.mxu0 0.0
      %211 = vmatprep.subr.mxu0 0.0
      %212 = vmatpush1.msra.mxu0 0.0
      %213 = vmatprep.subr.mxu0 0.0
      %214 = vmatpush1.msra.mxu0 0.0
      %215 = vmatprep.subr.mxu0 0.0
      %216 = vmatpush1.msra.mxu0 0.0
      %217 = vmatprep.subr.mxu0 0.0
      %218 = vmatpush1.msra.mxu0 0.0
      %219 = vmatprep.subr.mxu0 0.0
      %220 = vmatpush1.msra.mxu0 0.0
      %221 = vmatprep.subr.mxu0 0.0
      %222 = vmatpush1.msra.mxu0 0.0
      %223 = vmatprep.subr.mxu0 0.0
      %224 = vmatpush1.msra.mxu0 0.0
      %225 = vmatprep.subr.mxu0 0.0
      %226 = vmatpush1.msra.mxu0 0.0
      %227 = vmatprep.subr.mxu0 0.0
      %228 = vmatpush1.msra.mxu0 0.0
      %229 = vmatprep.subr.mxu0 0.0
      %230 = vmatpush1.msra.mxu0 0.0
      %231 = vmatprep.subr.mxu0 0.0
      %232 = vmatpush1.msra.mxu0 0.0
      %233 = vmatprep.mubr.f32.mxu0 0.0
      %234 = vmatmul.mubr.f32.gmra.mrb[0].mxu0 %v151
      %v235 = vpop.f32.mrb[0].mxu0
      %v236 = vadd.f32 0.0, %v235
      %v237 = vpop.f32.mrb[0].mxu0
      %238 = vmatprep.mubr.f32.mxu0 0.0
      %239 = vmatmul.mubr.f32.gmra.mrb[0].mxu0 %v152
      %v240 = vpop.f32.mrb[0].mxu0
      %v241 = vadd.f32 0.0, %v240
      %v242 = vpop.f32.mrb[0].mxu0
      %243 = vdwg.mxu0
      %v244 = vld [vmem:[#allocation2] sm:$0xff]
      %v245 = vld [vmem:[#allocation2 + $0x8] sm:$0xff]
      %v246 = vadd.f32 %v244, %v236
      %v247 = vadd.f32 %v245, %v241
      %248 = vst [vmem:[#allocation6] sm:$0xff] %v246
      %249 = vst [vmem:[#allocation6 + $0x8] sm:$0xff] %v247
    $region33: #{apply.3} parent=1 // pred_fallthru
      _
    // Predicated region
    $region34: #{apply.3} parent=1 // pred_check
      _
    $region35: #{apply.3} parent=1 // pred_check_branch
      %251 = sbr.rel (0) target = $region37
    $region36: #{apply.3} parent=1 // pred_region
      %s253 = ssub.s32 256, 256
      %254 = vsyncadd [#allocation5], %s253
      %s255 = sshll.u32 [#allocation6], 4
      %s256 = int_to_ptr.vmem [resolvable:$true] %s255
      %261 = dma.vmem_to_hbm [thread:$0]  %s256, 256, %s5, [#allocation5], 128, 128, 8
    $region37: #{apply.3} parent=1 // pred_fallthru
      _
    // Predicated region
    $region38: #{apply.3} parent=1 // pred_check
      _
    $region39: #{apply.3} parent=1 // pred_check_branch
      %263 = sbr.rel (0) target = $region41
    $region40: #{apply.3} parent=1 // pred_region
      %264 = dma.done [#allocation5], 256
    $region41: #{apply.3} parent=1 // pred_fallthru
      _
    %265 = vsyncpa [#allocation4], 1
    %266 = vsyncpa [#allocation5], 1

// kernel: apply.2
$region0: #{apply.2}
  #allocation0 [shape = 'u32[]', space=smem, size = 0x4, offset = 0x4, fixed_abs, tag = 'smem constant byte address 0x4 - core index']
  #allocation1 [shape = 'u32[144,128]{1,0:T(1,128)}', space=vmem, size = 0x12000, scoped, tag = 'internal scratch']
  #allocation2 [shape = 'f32[16,128]{1,0:T(8,128)}', space=vmem, size = 0x2000, scoped, tag = 'scratch operand']
  %s0 = inlined_call_operand.vmem [shape: f32[16,128], index: 0, kind: input, shape index: {}]
  %s1 = inlined_call_operand.hbm [shape: f32[128,128], index: 1, kind: input, shape index: {}]
  %s2 = inlined_call_operand.vmem [shape: f32[16,128], index: 2, kind: output, shape index: {}]
  %s3 = sld [smem:[#allocation0]]
  $region30: #{apply.2} parent=0
    _
  %s5 = ssub.s32 1, %s3
  %s6 = scalar_select 0, %s5, %s3
  $region1: #{apply.2} parent=0
    #allocation3 [shape = 'u8[65536]{0}', space=vmem, size = 0x10000, scoped, tag = 'input window, operand 1, single buffered']
    #allocation4 [shape = 's32[1]{0}', space=sflag, size = 0x4, scoped, tag = 'scoped memory for apply.2']
    %7 = vsyncpa [#allocation4], 0
    // Predicated region
    $region2: #{apply.2} parent=1 // pred_check
      _
    $region3: #{apply.2} parent=1 // pred_check_branch
      %9 = sbr.rel (0) target = $region5
    $region4: #{apply.2} parent=1 // pred_region
      _
    $region5: #{apply.2} parent=1 // pred_fallthru
      _
    // Predicated region
    $region6: #{apply.2} parent=1 // pred_check
      _
    $region7: #{apply.2} parent=1 // pred_check_branch
      %11 = sbr.rel (0) target = $region9
    $region8: #{apply.2} parent=1 // pred_region
      %s13 = ssub.s32 2048, 2048
      %14 = vsyncadd [#allocation4], %s13
      %s15 = sshll.u32 [#allocation3], 4
      %s16 = int_to_ptr.vmem [resolvable:$true] %s15
      %21 = dma.hbm_to_vmem [thread:$0]  %s1, 2048, %s16, [#allocation4], 128, 128, 8
    $region9: #{apply.2} parent=1 // pred_fallthru
      _
    // Predicated region
    $region10: #{apply.2} parent=1 // pred_check
      _
    $region11: #{apply.2} parent=1 // pred_check_branch
      %23 = sbr.rel (0) target = $region13
    $region12: #{apply.2} parent=1 // pred_region
      %24 = dma.done [#allocation4], 2048
    $region13: #{apply.2} parent=1 // pred_fallthru
      _
    %p25 = scmp.eq.s32.totalorder 0, 0
    // Predicated region
    $region14: #{apply.2} parent=1 // pred_check
      %p26 = pneg %p25
    $region15: #{apply.2} parent=1 // pred_check_branch
      %28 = sbr.rel (%p26) target = $region17
    $region16: #{apply.2} parent=1 // pred_region
      %29 = vst [vmem:[#allocation2] sm:$0xff] 0.0
      %30 = vst [vmem:[#allocation2 + $0x8] sm:$0xff] 0.0
    $region17: #{apply.2} parent=1 // pred_fallthru
      _
    %v31 = vld [vmem:[#allocation2] sm:$0xff]
    %v32 = vld [vmem:[#allocation2 + $0x8] sm:$0xff]
    %v33 = vld [vmem:[%s0] sm:$0xff]
    %v34 = vld [vmem:[%s0 + $0x8] sm:$0xff]
    %v35 = vld [vmem:[#allocation3] sm:$0xff]
    %v36 = vld [vmem:[#allocation3 + $0x8] sm:$0xff]
    %v37 = vld [vmem:[#allocation3 + $0x10] sm:$0xff]
    %v38 = vld [vmem:[#allocation3 + $0x18] sm:$0xff]
    %v39 = vld [vmem:[#allocation3 + $0x20] sm:$0xff]
    %v40 = vld [vmem:[#allocation3 + $0x28] sm:$0xff]
    %v41 = vld [vmem:[#allocation3 + $0x30] sm:$0xff]
    %v42 = vld [vmem:[#allocation3 + $0x38] sm:$0xff]
    %v43 = vld [vmem:[#allocation3 + $0x40] sm:$0xff]
    %v44 = vld [vmem:[#allocation3 + $0x48] sm:$0xff]
    %v45 = vld [vmem:[#allocation3 + $0x50] sm:$0xff]
    %v46 = vld [vmem:[#allocation3 + $0x58] sm:$0xff]
    %v47 = vld [vmem:[#allocation3 + $0x60] sm:$0xff]
    %v48 = vld [vmem:[#allocation3 + $0x68] sm:$0xff]
    %v49 = vld [vmem:[#allocation3 + $0x70] sm:$0xff]
    %v50 = vld [vmem:[#allocation3 + $0x78] sm:$0xff]
    %51 = vmatprep.subr.mxu0 0.0
    %52 = vmatpush1.msra.mxu0 %v35
    %53 = vmatprep.subr.mxu0 0.0
    %54 = vmatpush1.msra.mxu0 %v36
    %55 = vmatprep.subr.mxu0 0.0
    %56 = vmatpush1.msra.mxu0 %v37
    %57 = vmatprep.subr.mxu0 0.0
    %58 = vmatpush1.msra.mxu0 %v38
    %59 = vmatprep.subr.mxu0 0.0
    %60 = vmatpush1.msra.mxu0 %v39
    %61 = vmatprep.subr.mxu0 0.0
    %62 = vmatpush1.msra.mxu0 %v40
    %63 = vmatprep.subr.mxu0 0.0
    %64 = vmatpush1.msra.mxu0 %v41
    %65 = vmatprep.subr.mxu0 0.0
    %66 = vmatpush1.msra.mxu0 %v42
    %67 = vmatprep.subr.mxu0 0.0
    %68 = vmatpush1.msra.mxu0 %v43
    %69 = vmatprep.subr.mxu0 0.0
    %70 = vmatpush1.msra.mxu0 %v44
    %71 = vmatprep.subr.mxu0 0.0
    %72 = vmatpush1.msra.mxu0 %v45
    %73 = vmatprep.subr.mxu0 0.0
    %74 = vmatpush1.msra.mxu0 %v46
    %75 = vmatprep.subr.mxu0 0.0
    %76 = vmatpush1.msra.mxu0 %v47
    %77 = vmatprep.subr.mxu0 0.0
    %78 = vmatpush1.msra.mxu0 %v48
    %79 = vmatprep.subr.mxu0 0.0
    %80 = vmatpush1.msra.mxu0 %v49
    %81 = vmatprep.subr.mxu0 0.0
    %82 = vmatpush1.msra.mxu0 %v50
    %83 = vmatprep.subr.mxu0 0.0
    %84 = vmatpush1.msra.mxu0 0.0
    %85 = vmatprep.subr.mxu0 0.0
    %86 = vmatpush1.msra.mxu0 0.0
    %87 = vmatprep.subr.mxu0 0.0
    %88 = vmatpush1.msra.mxu0 0.0
    %89 = vmatprep.subr.mxu0 0.0
    %90 = vmatpush1.msra.mxu0 0.0
    %91 = vmatprep.subr.mxu0 0.0
    %92 = vmatpush1.msra.mxu0 0.0
    %93 = vmatprep.subr.mxu0 0.0
    %94 = vmatpush1.msra.mxu0 0.0
    %95 = vmatprep.subr.mxu0 0.0
    %96 = vmatpush1.msra.mxu0 0.0
    %97 = vmatprep.subr.mxu0 0.0
    %98 = vmatpush1.msra.mxu0 0.0
    %99 = vmatprep.subr.mxu0 0.0
    %100 = vmatpush1.msra.mxu0 0.0
    %101 = vmatprep.subr.mxu0 0.0
    %102 = vmatpush1.msra.mxu0 0.0
    %103 = vmatprep.subr.mxu0 0.0
    %104 = vmatpush1.msra.mxu0 0.0
    %105 = vmatprep.subr.mxu0 0.0
    %106 = vmatpush1.msra.mxu0 0.0
    %107 = vmatprep.subr.mxu0 0.0
    %108 = vmatpush1.msra.mxu0 0.0
    %109 = vmatprep.subr.mxu0 0.0
    %110 = vmatpush1.msra.mxu0 0.0
    %111 = vmatprep.subr.mxu0 0.0
    %112 = vmatpush1.msra.mxu0 0.0
    %113 = vmatprep.subr.mxu0 0.0
    %114 = vmatpush1.msra.mxu0 0.0
    %115 = vmatprep.mubr.f32.mxu0 0.0
    %116 = vmatmul.mubr.f32.gmra.mrb[0].mxu0 %v33
    %v117 = vpop.f32.mrb[0].mxu0
    %v118 = vadd.f32 0.0, %v117
    %v119 = vpop.f32.mrb[0].mxu0
    %120 = vmatprep.mubr.f32.mxu0 0.0
    %121 = vmatmul.mubr.f32.gmra.mrb[0].mxu0 %v34
    %v122 = vpop.f32.mrb[0].mxu0
    %v123 = vadd.f32 0.0, %v122
    %v124 = vpop.f32.mrb[0].mxu0
    %125 = vdwg.mxu0
    %v126 = vadd.f32 %v31, %v118
    %v127 = vadd.f32 %v32, %v123
    %128 = vst [vmem:[#allocation2] sm:$0xff] %v126
    %129 = vst [vmem:[#allocation2 + $0x8] sm:$0xff] %v127
    // Predicated region
    $region18: #{apply.2} parent=1 // pred_check
      %p130 = pneg %p25
    $region19: #{apply.2} parent=1 // pred_check_branch
      %132 = sbr.rel (%p130) target = $region21
    $region20: #{apply.2} parent=1 // pred_region
      %v133 = vld [vmem:[#allocation2] sm:$0xff]
      %v134 = vld [vmem:[#allocation2 + $0x8] sm:$0xff]
      %135 = vst [vmem:[%s2] sm:$0xff] %v133
      %136 = vst [vmem:[%s2 + $0x8] sm:$0xff] %v134
    $region21: #{apply.2} parent=1 // pred_fallthru
      _
    // Predicated region
    $region22: #{apply.2} parent=1 // pred_check
      _
    $region23: #{apply.2} parent=1 // pred_check_branch
      %138 = sbr.rel (0) target = $region25
    $region24: #{apply.2} parent=1 // pred_region
      _
    $region25: #{apply.2} parent=1 // pred_fallthru
      _
    // Predicated region
    $region26: #{apply.2} parent=1 // pred_check
      _
    $region27: #{apply.2} parent=1 // pred_check_branch
      %140 = sbr.rel (0) target = $region29
    $region28: #{apply.2} parent=1 // pred_region
      _
    $region29: #{apply.2} parent=1 // pred_fallthru
      _
    %141 = vsyncpa [#allocation4], 1

</llo_original>
